<compile_context>
chip_gen: v6e
topology: v6e:2x2x1
jax: 0.10.0
libtpu: 0.0.40
codegen_flags: <defaults>
</compile_context>

<pallas_src>
import jax
import jax.numpy as jnp
from jax.experimental import pallas as pl
from jax.experimental.pallas import tpu as pltpu


def _round_up(v, m):
    return ((v + m - 1) // m) * m


# ---- Pure HBM->HBM DMA copy (preferred materialized copy) ------------------
def _dma_copy_kernel(x_hbm_ref, o_hbm_ref, sem):
    cp = pltpu.make_async_copy(x_hbm_ref, o_hbm_ref, sem)
    cp.start()
    cp.wait()


def identity_copy(x):
    """Materialized identity copy: one HBM->HBM DMA, no VMEM staging."""
    if x.size == 0:
        return x
    itemsize = jnp.dtype(x.dtype).itemsize
    return pl.pallas_call(
        _dma_copy_kernel,
        out_shape=jax.ShapeDtypeStruct(x.shape, x.dtype),
        in_specs=[pl.BlockSpec(memory_space=pl.ANY)],
        out_specs=pl.BlockSpec(memory_space=pl.ANY),
        scratch_shapes=[pltpu.SemaphoreType.DMA(())],
        compiler_params=pltpu.CompilerParams(has_side_effects=True),
        cost_estimate=pl.CostEstimate(
            flops=0,
            transcendentals=0,
            bytes_accessed=2 * x.size * itemsize,
        ),
    )(x)


# ---- Tiled VMEM-pipelined copy (template for later fused compute) ----------
def _copy_tile_kernel(x_ref, o_ref):
    # One lane-dense tile: unmasked full-vreg load/store (edge block masked
    # automatically by Pallas when the grid does not divide evenly).
    o_ref[...] = x_ref[...]


def identity_copy_tiled(x, *, target_tile_bytes=8 * 1024 * 1024):
    """Lane-dense, ~8 MiB-tiled streaming copy through VMEM."""
    if x.size == 0:
        return x
    orig_shape = x.shape
    dtype = x.dtype
    itemsize = jnp.dtype(dtype).itemsize
    total = x.size

    # Largest lane width (multiple of 128) that exactly divides the flat
    # size: the reshape is free and no padding / lane masking is needed.
    lanes = next((c for c in (1024, 512, 256, 128) if total % c == 0), 0)
    if lanes == 0:
        # TODO(synk): sizes not divisible by 128 fall back to the pure
        # HBM->HBM DMA copy above, which has no layout constraints.
        return identity_copy(x)

    rows = total // lanes
    x2 = x.reshape(rows, lanes)

    # Minimum sublane tile for this dtype (f32: 8, bf16: 16, int8/fp8: 32).
    min_rows = max(8, 32 // itemsize)

    if rows <= min_rows:
        tm = rows  # single full block; block shape == array dims is legal
    else:
        tile_rows_max = max(min_rows, target_tile_bytes // (lanes * itemsize))
        # Balance tile sizes (avoid a nearly-empty trailing tile) and keep
        # >= 4 blocks when the tensor is big enough so both v7x TensorCores
        # participate under "parallel".  v5e/v6e are single-TC; harmless.
        n_tiles = max(pl.cdiv(rows, tile_rows_max),
                      min(4, pl.cdiv(rows, min_rows)))
        tm = min(rows, _round_up(pl.cdiv(rows, n_tiles), min_rows))
    grid_n = pl.cdiv(rows, tm)  # partial edge block is masked by Pallas

    out2 = pl.pallas_call(
        _copy_tile_kernel,
        out_shape=jax.ShapeDtypeStruct((rows, lanes), dtype),
        grid_spec=pltpu.PrefetchScalarGridSpec(
            num_scalar_prefetch=0,
            grid=(grid_n,),
            in_specs=[pl.BlockSpec((tm, lanes), lambda i: (i, 0))],
            out_specs=pl.BlockSpec((tm, lanes), lambda i: (i, 0)),
        ),
        compiler_params=pltpu.CompilerParams(
            dimension_semantics=("parallel",),
            # 2 in-bufs + 2 out-bufs x ~8 MiB = ~32 MiB; 48 MiB leaves
            # headroom under v7x's 64 MiB physical VMEM and is well under
            # v5e/v6e's 128 MiB.
            vmem_limit_bytes=48 << 20,
        ),
        cost_estimate=pl.CostEstimate(
            flops=0,
            transcendentals=0,
            bytes_accessed=2 * total * itemsize,
        ),
    )(x2)
    return out2.reshape(orig_shape)


# ---- IdentityFirstStage API -------------------------------------------------
# Pure pass-through: no kernel launch, no HBM round-trip (optimal on all gens).
def identity_first_stage_forward(x):
    return x


def identity_first_stage_encode(x):
    return x


def identity_first_stage_decode(x):
    return x


def identity_first_stage_quantize(x, vq_interface=False):
    if vq_interface:
        return (x, None, [None, None, None])
    return x


if __name__ == "__main__":
    # IdentityFirstStage has no parameters; nothing to initialize.
    key = jax.random.PRNGKey(0)
    x = jax.random.normal(key, (2, 4, 16, 16), dtype=jnp.float32)  # NCHW

    # Module semantics: forward/encode/decode are zero-cost pass-throughs.
    y = jax.block_until_ready(identity_first_stage_forward(x))
    assert y.shape == x.shape and y.dtype == x.dtype
    assert bool(jnp.all(y == x))

    # HBM->HBM DMA copy (only when a materialized copy is explicitly needed).
    y_dma = jax.block_until_ready(identity_copy(x))
    assert y_dma.shape == x.shape and y_dma.dtype == x.dtype
    assert bool(jnp.all(y_dma == x))

    # Tiled VMEM-pipelined copy: exact-fit case ...
    y_tiled = jax.block_until_ready(identity_copy_tiled(x))
    assert y_tiled.shape == x.shape and bool(jnp.all(y_tiled == x))

    # ... and a case that exercises the masked partial edge block (45 rows
    # of 1024 lanes -> 3 blocks of 16 rows, last one masked).
    x2 = jax.random.normal(jax.random.PRNGKey(1), (3, 5, 24, 128),
                           dtype=jnp.float32)
    y2 = jax.block_until_ready(identity_copy_tiled(x2))
    assert y2.shape == x2.shape and bool(jnp.all(y2 == x2))

    # quantize with vq_interface wraps the tensor in a tuple.
    q, _, extras = identity_first_stage_quantize(x, vq_interface=True)
    assert bool(jnp.all(q == x)) and extras == [None, None, None]

    print("KERNEL_OK")
</pallas_src>

<mosaic_0001>
module attributes {stable_mosaic.version = 11 : i64} {
  func.func @_dma_copy_kernel(%arg0: memref<2x4x16x16xf32, #tpu.memory_space<any>>, %arg1: memref<2x4x16x16xf32, #tpu.memory_space<any>>, %arg2: memref<!tpu.dma_semaphore, #tpu.memory_space<semaphore_mem>>) attributes {dimension_semantics = [], scalar_prefetch = 0 : i64, scratch_operands = 1 : i64, tpu.core_type = #tpu.core_type<tc>} {
    tpu.enqueue_dma source(%arg0 : memref<2x4x16x16xf32, #tpu.memory_space<any>>) target(%arg1 : memref<2x4x16x16xf32, #tpu.memory_space<any>>) target_semaphore(%arg2 : memref<!tpu.dma_semaphore, #tpu.memory_space<semaphore_mem>>)
    tpu.wait_dma2 semaphore(%arg2 : memref<!tpu.dma_semaphore, #tpu.memory_space<semaphore_mem>>) src(%arg0 : memref<2x4x16x16xf32, #tpu.memory_space<any>>) dst(%arg1 : memref<2x4x16x16xf32, #tpu.memory_space<any>>)
    return
  }
}

</mosaic_0001>

<llo_original>
// kernel: tpu_custom_call.1
$region0: #{tpu_custom_call.1}
  #allocation0 [shape = 'u32[]', space=smem, size = 0x4, offset = 0x4, fixed_abs, tag = 'smem constant byte address 0x4 - core index']
  #allocation1 [shape = 'u32[144,128]{1,0:T(1,128)}', space=vmem, size = 0x12000, scoped, tag = 'internal scratch']
  #allocation2 [shape = 's32[1]{0}', space=sflag, size = 0x4, scoped, tag = 'scratch operand']
  #allocation3 [shape = 's32[]', space=sflag, size = 0x4, offset = 0, fixed_abs, tag = 'sflag constant byte address 0x0 - dummy sync flag']
  #allocation4 [shape = 'u32[0]{0}', space=smem, size = 0, offset = 0, fixed_abs, tag = 'smem constant byte address 0x0 - null']
  %s0 = inlined_call_operand.hbm [shape: f32[2,4,16,16], index: 0, kind: input, shape index: {}]
  %s1 = inlined_call_operand.hbm [shape: f32[2,4,16,16], index: 1, kind: output, shape index: {}]
  %s2 = sld [smem:[#allocation0]]
  $region2: #{tpu_custom_call.1} parent=0
    _
  %s4 = ssub.s32 1, %s2
  %s5 = scalar_select 0, %s4, %s2
  %s7 = sshll.u32 1, 14
  %s8 = sxor.u32 4294967295, %s7
  %12 = dma.general %s0, 2048, %s1, [#allocation2], 131072, [#allocation4], 0, 0
  %s13 = smul.u32 2, 4
  %s14 = smul.u32 %s13, 16
  %s15 = smul.u32 %s14, 1
  %s16 = sshll.u32 %s15, 4
  %17 = dma.done [#allocation2], %s16
  %18 = vsyncmov [#allocation2]
  %s19 = vpop.sfrf %18
  %p20 = scmp.eq.s32.totalorder %s19, 0
  %p21 = pneg %p20
  %23 = shalt.err (%p21)

</llo_original>
